<compile_context>
chip_gen: v6e
topology: v6e:2x2x1
jax: 0.10.0
libtpu: 0.0.40
codegen_flags: <defaults>
</compile_context>

<pallas_src>
import functools
import math

import jax
import jax.numpy as jnp
from jax.experimental import pallas as pl
from jax.experimental.pallas import tpu as pltpu


def _round_up(x, m):
    return ((x + m - 1) // m) * m


def _cparams(*sems):
    return pltpu.CompilerParams(dimension_semantics=tuple(sems),
                                vmem_limit_bytes=32 * 1024 * 1024)


# --------------------------------------------------------------------------
# Tiled matmul: bf16 MXU inputs, f32 accumulation, fused bias (+ SiLU)
# (+ residual add) epilogue
# --------------------------------------------------------------------------

def _matmul_kernel(a_ref, b_ref, bias_ref, *rest, activation, has_residual):
    if has_residual:
        res_ref, o_ref, acc_ref = rest
    else:
        o_ref, acc_ref = rest

    @pl.when(pl.program_id(2) == 0)
    def _():
        acc_ref[...] = jnp.zeros_like(acc_ref)

    acc_ref[...] += jnp.dot(a_ref[...], b_ref[...],
                            preferred_element_type=jnp.float32)

    @pl.when(pl.program_id(2) == pl.num_programs(2) - 1)
    def _():
        y = acc_ref[...] + bias_ref[...]
        if activation == "silu":
            y = y * jax.nn.sigmoid(y)
        if has_residual:
            y = y + res_ref[...]
        o_ref[...] = y.astype(o_ref.dtype)


def pallas_matmul(a, b, bias=None, activation=None, residual=None,
                  bm=512, bn=512, bk=512):
    """(M, K) @ (K, N) + bias [+ residual], optional fused SiLU.  f32 out."""
    M, K = a.shape
    K2, N = b.shape
    assert K == K2
    if bias is None:
        bias = jnp.zeros((N,), jnp.float32)

    a = a.astype(jnp.bfloat16)
    b = b.astype(jnp.bfloat16)
    bias = bias.astype(jnp.float32)

    # Lane-dense N (multiple of 128), sublane-aligned M, K tiled only if big.
    Np = _round_up(N, 128)
    bn_ = min(bn, Np)
    while Np % bn_ != 0:
        bn_ -= 128
    bm_ = min(bm, _round_up(M, 8))
    Mp = _round_up(M, bm_)
    if K > bk:
        bk_ = bk
        Kp = _round_up(K, bk_)
    else:
        bk_ = K
        Kp = K

    if (Mp, Kp) != (M, K):
        a = jnp.pad(a, ((0, Mp - M), (0, Kp - K)))
    if (Kp, Np) != (K, N):
        b = jnp.pad(b, ((0, Kp - K), (0, Np - N)))
    if Np != N:
        bias = jnp.pad(bias, (0, Np - N))
    bias2 = bias.reshape(1, Np)

    has_residual = residual is not None
    in_specs = [pl.BlockSpec((bm_, bk_), lambda i, j, k: (i, k)),
                pl.BlockSpec((bk_, bn_), lambda i, j, k: (k, j)),
                pl.BlockSpec((1, bn_), lambda i, j, k: (0, j))]
    operands = [a, b, bias2]
    if has_residual:
        res = residual.astype(jnp.float32)
        if res.shape != (Mp, Np):
            res = jnp.pad(res, ((0, Mp - M), (0, Np - N)))
        in_specs.append(pl.BlockSpec((bm_, bn_), lambda i, j, k: (i, j)))
        operands.append(res)

    out = pl.pallas_call(
        functools.partial(_matmul_kernel, activation=activation,
                          has_residual=has_residual),
        out_shape=jax.ShapeDtypeStruct((Mp, Np), jnp.float32),
        grid=(Mp // bm_, Np // bn_, Kp // bk_),
        in_specs=in_specs,
        out_specs=pl.BlockSpec((bm_, bn_), lambda i, j, k: (i, j)),
        scratch_shapes=[pltpu.VMEM((bm_, bn_), jnp.float32)],
        compiler_params=_cparams("parallel", "parallel", "arbitrary"),
    )(*operands)
    return out[:M, :N]


def linear(x, p, activation=None, residual=None):
    return pallas_matmul(x, p["w"], p["b"], activation, residual=residual)


# --------------------------------------------------------------------------
# GroupNorm (+ fused SiLU, + fused per-batch channel-bias add) - NHWC,
# no transposes, gridded over batch
# --------------------------------------------------------------------------

def _groupnorm_kernel(x_ref, g_ref, b_ref, *rest, eps, apply_silu,
                      inv_count, has_add):
    if has_add:
        add_ref, agg_ref, o_ref = rest
    else:
        agg_ref, o_ref = rest
    x = x_ref[0]                                      # (S, C) f32
    if has_add:
        x = x + add_ref[...]                          # fused time-emb add
    agg = agg_ref[...]                                # (C, G) f32, 0/1
    s1 = jnp.sum(x, axis=0, keepdims=True)            # (1, C)
    s2 = jnp.sum(x * x, axis=0, keepdims=True)        # (1, C)
    gsum = jnp.dot(s1, agg, preferred_element_type=jnp.float32)   # (1, G)
    gsq = jnp.dot(s2, agg, preferred_element_type=jnp.float32)    # (1, G)
    mean_g = gsum * inv_count
    var_g = jnp.maximum(gsq * inv_count - mean_g * mean_g, 0.0)
    # Spread group stats back to channels: (1, G) contracted with (C, G).
    dn = (((1,), (1,)), ((), ()))
    mean_c = jax.lax.dot_general(mean_g, agg, dn,
                                 preferred_element_type=jnp.float32)  # (1, C)
    var_c = jax.lax.dot_general(var_g, agg, dn,
                                preferred_element_type=jnp.float32)   # (1, C)
    y = (x - mean_c) * jax.lax.rsqrt(var_c + eps) * g_ref[...] + b_ref[...]
    if apply_silu:
        y = y * jax.nn.sigmoid(y)
    o_ref[0] = y


def groupnorm(x, gamma, beta, num_groups, apply_silu=False, eps=1e-5,
              channel_add=None):
    """GroupNorm (PyTorch semantics) on NHWC, optional fused SiLU.
    `channel_add` is an optional (B, C) bias added before the norm (used to
    fuse the time-embedding add of the resblock)."""
    B, H, W, C = x.shape
    G = num_groups
    Cg = C // G
    S = H * W
    xr = x.reshape(B, S, C).astype(jnp.float32)
    agg = (jnp.arange(C)[:, None] // Cg ==
           jnp.arange(G)[None, :]).astype(jnp.float32)            # (C, G)

    has_add = channel_add is not None
    in_specs = [pl.BlockSpec((1, S, C), lambda b: (b, 0, 0)),
                pl.BlockSpec((1, C), lambda b: (0, 0)),
                pl.BlockSpec((1, C), lambda b: (0, 0))]
    operands = [xr, gamma.reshape(1, C).astype(jnp.float32),
                beta.reshape(1, C).astype(jnp.float32)]
    if has_add:
        in_specs.append(pl.BlockSpec((1, C), lambda b: (b, 0)))
        operands.append(channel_add.astype(jnp.float32).reshape(B, C))
    in_specs.append(pl.BlockSpec((C, G), lambda b: (0, 0)))
    operands.append(agg)

    y = pl.pallas_call(
        functools.partial(_groupnorm_kernel, eps=eps, apply_silu=apply_silu,
                          inv_count=1.0 / float(S * Cg), has_add=has_add),
        out_shape=jax.ShapeDtypeStruct((B, S, C), jnp.float32),
        grid=(B,),
        in_specs=in_specs,
        out_specs=pl.BlockSpec((1, S, C), lambda b: (b, 0, 0)),
        compiler_params=_cparams("parallel"),
    )(*operands)
    return y.reshape(B, H, W, C)


# --------------------------------------------------------------------------
# Flash-style multi-head self-attention
# --------------------------------------------------------------------------

def _flash_attn_kernel(q_ref, k_ref, v_ref, o_ref, m_sc, l_sc, acc_sc, *,
                       scale, s_len, tk, need_mask):
    kv = pl.program_id(2)

    @pl.when(kv == 0)
    def _():
        m_sc[...] = jnp.full(m_sc.shape, -1e30, jnp.float32)
        l_sc[...] = jnp.zeros(l_sc.shape, jnp.float32)
        acc_sc[...] = jnp.zeros(acc_sc.shape, jnp.float32)

    q = q_ref[0]                                       # (tq, Dp) bf16
    k = k_ref[0]                                       # (tk, Dp) bf16
    v = v_ref[0]                                       # (tk, Dp) bf16
    s = jax.lax.dot_general(q, k, (((1,), (1,)), ((), ())),
                            preferred_element_type=jnp.float32) * scale
    if need_mask:
        kpos = kv * tk + jax.lax.broadcasted_iota(jnp.int32, (1, tk), 1)
        s = jnp.where(kpos < s_len, s, -1e30)

    m_prev = m_sc[0]                                   # (tq, 1)
    m_new = jnp.maximum(m_prev, jnp.max(s, axis=-1, keepdims=True))
    alpha = jnp.exp(m_prev - m_new)
    p = jnp.exp(s - m_new)
    l_sc[0] = alpha * l_sc[0] + jnp.sum(p, axis=-1, keepdims=True)
    acc_sc[0] = alpha * acc_sc[0] + jnp.dot(p.astype(v.dtype), v,
                                            preferred_element_type=jnp.float32)
    m_sc[0] = m_new

    @pl.when(kv == pl.num_programs(2) - 1)
    def _():
        o_ref[0] = (acc_sc[0] * pl.reciprocal(l_sc[0], approx=True)
                    ).astype(o_ref.dtype)


def pallas_attention(q, k, v):
    """q, k, v: (B*heads, S, D) -> (B*heads, S, D) (online-softmax flash)."""
    BH, S, D = q.shape
    scale = 1.0 / math.sqrt(D)

    Dp = _round_up(D, 128)                 # lane-dense head dim
    tile = min(128, _round_up(S, 8))
    Sp = _round_up(S, tile)

    def prep(x):
        x = x.astype(jnp.bfloat16)
        if (Sp, Dp) != (S, D):
            x = jnp.pad(x, ((0, 0), (0, Sp - S), (0, Dp - D)))
        return x

    qp, kp, vp = prep(q), prep(k), prep(v)

    out = pl.pallas_call(
        functools.partial(_flash_attn_kernel, scale=scale, s_len=S, tk=tile,
                          need_mask=(Sp != S)),
        out_shape=jax.ShapeDtypeStruct((BH, Sp, Dp), jnp.float32),
        grid=(BH, Sp // tile, Sp // tile),
        in_specs=[pl.BlockSpec((1, tile, Dp), lambda b, i, j: (b, i, 0)),
                  pl.BlockSpec((1, tile, Dp), lambda b, i, j: (b, j, 0)),
                  pl.BlockSpec((1, tile, Dp), lambda b, i, j: (b, j, 0))],
        out_specs=pl.BlockSpec((1, tile, Dp), lambda b, i, j: (b, i, 0)),
        scratch_shapes=[pltpu.VMEM((1, tile, 1), jnp.float32),
                        pltpu.VMEM((1, tile, 1), jnp.float32),
                        pltpu.VMEM((1, tile, Dp), jnp.float32)],
        compiler_params=_cparams("parallel", "parallel", "arbitrary"),
    )(qp, kp, vp)
    return out[:, :S, :D]


# --------------------------------------------------------------------------
# Convolutions
# --------------------------------------------------------------------------

def _conv2d_direct_kernel(x_ref, w_ref, bias_ref, *rest,
                          kh, kw, ho, wo, activation, has_residual):
    if has_residual:
        res_ref, o_ref = rest
    else:
        (o_ref,) = rest
    cout = o_ref.shape[-1]
    xv = x_ref[0]                                      # (Hp, Wp, Cin) bf16
    acc = jnp.zeros((ho * wo, cout), jnp.float32)
    for di in range(kh):
        for dj in range(kw):
            win = xv[di:di + ho, dj:dj + wo, :]        # shifted tap window
            a = win.reshape(ho * wo, win.shape[-1])
            acc = acc + jnp.dot(a, w_ref[di * kw + dj],
                                preferred_element_type=jnp.float32)
    y = acc + bias_ref[...]
    if activation == "silu":
        y = y * jax.nn.sigmoid(y)
    y = y.reshape(ho, wo, cout)
    if has_residual:
        y = y + res_ref[0]
    o_ref[0] = y.astype(o_ref.dtype)


def _direct_conv_fits(x_shape, w_shape, padding,
                      budget_bytes=20 * 1024 * 1024):
    B, H, W, Cin = x_shape
    kh, kw, _, Cout = w_shape
    Hp, Wp = H + 2 * padding, W + 2 * padding
    Ho, Wo = Hp - kh + 1, Wp - kw + 1
    x_b = Hp * Wp * Cin * 2
    w_b = kh * kw * Cin * Cout * 2
    o_b = Ho * Wo * Cout * 4
    tmp_b = Ho * Wo * max(Cin, Cout) * 4 * 4
    return 2 * (x_b + w_b + o_b) + tmp_b < budget_bytes


def _conv2d_direct(x, w, bias, padding, activation, residual):
    B, H, W, Cin = x.shape
    kh, kw, _, Cout = w.shape
    xp = jnp.pad(x, ((0, 0), (padding, padding), (padding, padding), (0, 0)))
    xp = xp.astype(jnp.bfloat16)
    Hp, Wp = H + 2 * padding, W + 2 * padding
    Ho, Wo = Hp - kh + 1, Wp - kw + 1
    wr = w.reshape(kh * kw, Cin, Cout).astype(jnp.bfloat16)
    b2 = bias.reshape(1, Cout).astype(jnp.float32)

    has_residual = residual is not None
    in_specs = [pl.BlockSpec((1, Hp, Wp, Cin), lambda b: (b, 0, 0, 0)),
                pl.BlockSpec((kh * kw, Cin, Cout), lambda b: (0, 0, 0)),
                pl.BlockSpec((1, Cout), lambda b: (0, 0))]
    operands = [xp, wr, b2]
    if has_residual:
        in_specs.append(pl.BlockSpec((1, Ho, Wo, Cout),
                                     lambda b: (b, 0, 0, 0)))
        operands.append(residual.astype(jnp.float32))

    return pl.pallas_call(
        functools.partial(_conv2d_direct_kernel, kh=kh, kw=kw, ho=Ho, wo=Wo,
                          activation=activation, has_residual=has_residual),
        out_shape=jax.ShapeDtypeStruct((B, Ho, Wo, Cout), jnp.float32),
        grid=(B,),
        in_specs=in_specs,
        out_specs=pl.BlockSpec((1, Ho, Wo, Cout), lambda b: (b, 0, 0, 0)),
        compiler_params=_cparams("parallel"),
    )(*operands)


def _conv2d_im2col(x, w, bias, stride, padding, activation, residual):
    B, H, W, Cin = x.shape
    kh, kw, _, Cout = w.shape
    xp = jnp.pad(x, ((0, 0), (padding, padding), (padding, padding), (0, 0)))
    Ho = (H + 2 * padding - kh) // stride + 1
    Wo = (W + 2 * padding - kw) // stride + 1
    patches = []
    for i in range(kh):
        for j in range(kw):
            patches.append(xp[:, i:i + stride * Ho:stride,
                               j:j + stride * Wo:stride, :])
    a = jnp.concatenate(patches, axis=-1).reshape(B * Ho * Wo, kh * kw * Cin)
    res = None if residual is None else residual.reshape(B * Ho * Wo, Cout)
    out = pallas_matmul(a, w.reshape(kh * kw * Cin, Cout), bias, activation,
                        residual=res)
    return out.reshape(B, Ho, Wo, Cout)


def conv2d(x, p, stride=1, padding=1, activation=None, residual=None):
    """NHWC conv.  1x1 -> fused matmul; stride-1 -> direct tap-loop kernel
    (no HBM im2col); strided (downsample) -> im2col + tiled matmul.
    `residual` (same shape as output) is added in the epilogue when given."""
    w, bias = p["w"], p["b"]
    kh, kw, Cin, Cout = w.shape
    if kh == 1 and kw == 1 and stride == 1 and padding == 0:
        B, H, W, _ = x.shape
        res = None if residual is None else residual.reshape(B * H * W, Cout)
        out = pallas_matmul(x.reshape(B * H * W, Cin), w.reshape(Cin, Cout),
                            bias, activation, residual=res)
        return out.reshape(B, H, W, Cout)
    if stride == 1 and _direct_conv_fits(x.shape, w.shape, padding):
        return _conv2d_direct(x, w, bias, padding, activation, residual)
    # TODO(synk): strided conv taps not yet folded into the kernel index_map;
    # still materializes im2col patches (only used by the downsample layers).
    return _conv2d_im2col(x, w, bias, stride, padding, activation, residual)


# --------------------------------------------------------------------------
# Parameter init (deterministic, in-script)
# --------------------------------------------------------------------------

_PKEY = jax.random.PRNGKey(0)
_PCOUNT = [0]


def _init(shape, scale):
    _PCOUNT[0] += 1
    k = jax.random.fold_in(_PKEY, _PCOUNT[0])
    return jax.random.normal(k, shape, jnp.float32) * scale


def init_conv(cin, cout, k=3):
    return {"w": _init((k, k, cin, cout), 1.0 / math.sqrt(k * k * cin)),
            "b": jnp.zeros((cout,), jnp.float32)}


def init_linear(cin, cout):
    return {"w": _init((cin, cout), 1.0 / math.sqrt(cin)),
            "b": jnp.zeros((cout,), jnp.float32)}


def init_gn(c):
    return {"g": jnp.ones((c,), jnp.float32), "b": jnp.zeros((c,), jnp.float32)}


def init_resblock(cin, cout, time_dim):
    return {"gn1": init_gn(cin), "conv1": init_conv(cin, cout),
            "time": init_linear(time_dim, cout),
            "gn2": init_gn(cout), "conv2": init_conv(cout, cout),
            "skip": init_conv(cin, cout, k=1) if cin != cout else None}


def init_attention(c):
    return {"gn": init_gn(c), "qkv": init_linear(c, 3 * c),
            "proj": init_linear(c, c)}


def init_diffusion_block(cin, cout, time_dim, num_res_layers):
    return {"res": [init_resblock(cin if i == 0 else cout, cout, time_dim)
                    for i in range(num_res_layers)],
            "attn": init_attention(cout)}


def init_unet(cfg):
    z_dim, channels, mid_channels = cfg["z_dim"], cfg["channels"], cfg["mid_channels"]
    time_dim, nrl, nclass = cfg["time_dim"], cfg["num_res_layers"], cfg["num_classes"]
    rev = channels[::-1]
    return {
        "class_emb": _init((nclass, time_dim), 0.05),
        "time_mlp": {"lin1": init_linear(time_dim, time_dim),
                     "lin2": init_linear(time_dim, time_dim)},
        "in_conv": init_conv(z_dim, channels[0]),
        "down_blocks": [init_diffusion_block(channels[i], channels[i + 1], time_dim, nrl)
                        for i in range(len(channels) - 1)],
        "downsamples": [init_conv(channels[i + 1], channels[i + 1])
                        for i in range(len(channels) - 1)],
        "mid_blocks": [init_diffusion_block(mid_channels[i], mid_channels[i + 1], time_dim, nrl)
                       for i in range(len(mid_channels) - 1)],
        "ups": [init_diffusion_block(rev[i] * 2, rev[i + 1], time_dim, nrl)
                for i in range(len(channels) - 1)],
        "upsamples": [init_conv(rev[i], rev[i])
                      for i in range(len(channels) - 1)],
        "out_gn": init_gn(channels[0]),
        "out_conv": init_conv(channels[0], z_dim),
    }


# --------------------------------------------------------------------------
# Forward pass (NHWC internally)
# --------------------------------------------------------------------------

def silu(x):
    return x * jax.nn.sigmoid(x)


def time_embedding(timestep, p, time_dim):
    # TODO(synk): TimeEmbedding source not provided; standard sinusoidal + MLP.
    half = time_dim // 2
    freqs = jnp.exp(-math.log(10000.0) * jnp.arange(half, dtype=jnp.float32) / half)
    args = timestep.astype(jnp.float32)[:, None] * freqs[None, :]
    emb = jnp.concatenate([jnp.sin(args), jnp.cos(args)], axis=-1)
    h = linear(emb, p["lin1"], activation="silu")      # SiLU fused in epilogue
    return linear(h, p["lin2"])


def resblock(x, t, p, num_groups):
    h = groupnorm(x, p["gn1"]["g"], p["gn1"]["b"], num_groups, apply_silu=True)
    h = conv2d(h, p["conv1"], stride=1, padding=1)
    temb = linear(silu(t), p["time"])                  # (B, Cout)
    # Time-embedding add fused into the second GroupNorm kernel.
    h = groupnorm(h, p["gn2"]["g"], p["gn2"]["b"], num_groups,
                  apply_silu=True, channel_add=temb)
    skip = x if p["skip"] is None else conv2d(x, p["skip"], stride=1, padding=0)
    # Residual add fused into the conv2 epilogue (single HBM pass).
    return conv2d(h, p["conv2"], stride=1, padding=1, residual=skip)


def attention(x, p, num_heads, num_groups):
    B, H, W, C = x.shape
    hd = C // num_heads
    S = H * W
    h = groupnorm(x, p["gn"]["g"], p["gn"]["b"], num_groups, apply_silu=False)
    qkv = linear(h.reshape(B * S, C), p["qkv"]).reshape(B, S, 3, num_heads, hd)
    q = qkv[:, :, 0].transpose(0, 2, 1, 3).reshape(B * num_heads, S, hd)
    k = qkv[:, :, 1].transpose(0, 2, 1, 3).reshape(B * num_heads, S, hd)
    v = qkv[:, :, 2].transpose(0, 2, 1, 3).reshape(B * num_heads, S, hd)
    o = pallas_attention(q, k, v)                      # (B*nh, S, hd)
    o = o.reshape(B, num_heads, S, hd).transpose(0, 2, 1, 3).reshape(B * S, C)
    # `x + proj(o)` residual fused into the projection matmul epilogue.
    o = linear(o, p["proj"], residual=x.reshape(B * S, C)).reshape(B, H, W, C)
    return o


def diffusion_block(x, t, p, cfg, out_down=None):
    # TODO(synk): DiffusionBlock source not provided; standard res-layers +
    # self-attention with skip-concat assumed.
    if out_down is not None:
        x = jnp.concatenate([x, out_down], axis=-1)
    for rp in p["res"]:
        x = resblock(x, t, rp, cfg["num_groups"])
    x = attention(x, p["attn"], cfg["num_heads"], cfg["num_groups"])
    return x


def downsample(x, p):
    # TODO(synk): Downsample assumed to be stride-2 3x3 conv.
    return conv2d(x, p, stride=2, padding=1)


def upsample(x, p):
    # TODO(synk): Upsample assumed nearest-2x + 3x3 conv; the repeat is not
    # yet folded into the conv kernel.
    x = jnp.repeat(jnp.repeat(x, 2, axis=1), 2, axis=2)
    return conv2d(x, p, stride=1, padding=1)


def unet_forward(params, cfg, x_nchw, timestep, context=None, context_mask=None):
    x = jnp.transpose(x_nchw, (0, 2, 3, 1)).astype(jnp.float32)   # NCHW -> NHWC

    t = time_embedding(timestep, params["time_mlp"], cfg["time_dim"])
    if context is not None:
        onehot = jax.nn.one_hot(context, cfg["num_classes"], dtype=jnp.float32)
        c = pallas_matmul(onehot, params["class_emb"])             # b c, c d -> b d
        if context_mask is not None:
            c = c * context_mask
        t = t + c

    x = conv2d(x, params["in_conv"], stride=1, padding=1)

    out_downs = []
    for i in range(len(params["down_blocks"])):
        x = diffusion_block(x, t, params["down_blocks"][i], cfg)
        out_downs.append(x)
        x = downsample(x, params["downsamples"][i])

    for i in range(len(params["mid_blocks"])):
        x = diffusion_block(x, t, params["mid_blocks"][i], cfg)

    for i in range(len(params["ups"])):
        out_down = out_downs.pop()
        x = upsample(x, params["upsamples"][i])
        x = diffusion_block(x, t, params["ups"][i], cfg, out_down=out_down)

    x = groupnorm(x, params["out_gn"]["g"], params["out_gn"]["b"],
                  cfg["num_groups"], apply_silu=True)
    x = conv2d(x, params["out_conv"], stride=1, padding=1)

    return jnp.transpose(x, (0, 3, 1, 2))                         # NHWC -> NCHW


# --------------------------------------------------------------------------

if __name__ == "__main__":
    cfg = dict(z_dim=4, channels=[8, 16], mid_channels=[16, 16], time_dim=32,
               num_res_layers=1, num_heads=2, num_groups=4, num_classes=10)
    B, H, W = 2, 16, 16

    params = init_unet(cfg)

    key = jax.random.PRNGKey(0)
    kx, = jax.random.split(key, 1)
    x = jax.random.normal(kx, (B, cfg["z_dim"], H, W), jnp.float32)   # NCHW input
    timestep = jnp.array([3, 17], dtype=jnp.int32)
    context = jnp.array([1, 7], dtype=jnp.int32)
    context_mask = jnp.ones((B, 1), jnp.float32)

    out = unet_forward(params, cfg, x, timestep, context, context_mask)
    out = jax.block_until_ready(out)
    assert out.shape == (B, cfg["z_dim"], H, W), out.shape
    assert bool(jnp.isfinite(out).all())
    print("KERNEL_OK")
</pallas_src>

<mosaic_0001>
module attributes {stable_mosaic.version = 11 : i64} {
  func.func @_matmul_kernel(%arg0: i32, %arg1: i32, %arg2: i32, %arg3: memref<8x32xbf16, #tpu.memory_space<vmem>>, %arg4: memref<32x128xbf16, #tpu.memory_space<vmem>>, %arg5: memref<1x128xf32, #tpu.memory_space<vmem>>, %arg6: memref<8x128xf32, #tpu.memory_space<vmem>>, %arg7: memref<8x128xf32, #tpu.memory_space<vmem>>) attributes {dimension_semantics = [#tpu.dimension_semantics<parallel>, #tpu.dimension_semantics<parallel>, #tpu.dimension_semantics<arbitrary>], iteration_bounds = array<i64: 1, 1, 1>, scalar_prefetch = 0 : i64, scratch_operands = 1 : i64, tpu.core_type = #tpu.core_type<tc>, window_params = [{transform_indices = @transform_0, window_bounds = array<i64: 8, 32>}, {transform_indices = @transform_1, window_bounds = array<i64: 32, 128>}, {transform_indices = @transform_2, window_bounds = array<i64: 1, 128>}, {transform_indices = @transform_3, window_bounds = array<i64: 8, 128>}]} {
    %c0_i32 = arith.constant 0 : i32
    %0 = arith.cmpi eq, %arg2, %c0_i32 : i32
    %1 = arith.extui %0 : i1 to i32
    %c0_i32_0 = arith.constant 0 : i32
    %2 = arith.cmpi ne, %1, %c0_i32_0 : i32
    scf.if %2 {
      %cst_10 = arith.constant 0.000000e+00 : f32
      %12 = vector.broadcast %cst_10 : f32 to vector<8x128xf32>
      %c0_11 = arith.constant 0 : index
      %c0_12 = arith.constant 0 : index
      %13 = vector.load %arg7[%c0_11, %c0_12] : memref<8x128xf32, #tpu.memory_space<vmem>>, vector<8x128xf32>
      tpu.vector_store %arg7[%c0_11, %c0_12], %12 {strides = array<i32>} : memref<8x128xf32, #tpu.memory_space<vmem>>, vector<8x128xf32>,
    } else {
    }
    %c0 = arith.constant 0 : index
    %c0_1 = arith.constant 0 : index
    %3 = vector.load %arg7[%c0, %c0_1] : memref<8x128xf32, #tpu.memory_space<vmem>>, vector<8x128xf32>
    %c0_2 = arith.constant 0 : index
    %c0_3 = arith.constant 0 : index
    %4 = vector.load %arg3[%c0_2, %c0_3] : memref<8x32xbf16, #tpu.memory_space<vmem>>, vector<8x32xbf16>
    %c0_4 = arith.constant 0 : index
    %c0_5 = arith.constant 0 : index
    %5 = vector.load %arg4[%c0_4, %c0_5] : memref<32x128xbf16, #tpu.memory_space<vmem>>, vector<32x128xbf16>
    %cst = arith.constant dense<0.000000e+00> : vector<8x128xf32>
    %6 = tpu.matmul %4, %5, %cst {dimension_numbers = #tpu.dot_dimension_numbers<[1], [0], [0], [1], [0, 0, 1, 1], [], []>} : vector<8x32xbf16>, vector<32x128xbf16>, vector<8x128xf32> -> vector<8x128xf32>
    %7 = arith.addf %3, %6 : vector<8x128xf32>
    %c0_6 = arith.constant 0 : index
    %c0_7 = arith.constant 0 : index
    %8 = vector.load %arg7[%c0_6, %c0_7] : memref<8x128xf32, #tpu.memory_space<vmem>>, vector<8x128xf32>
    tpu.vector_store %arg7[%c0_6, %c0_7], %7 {strides = array<i32>} : memref<8x128xf32, #tpu.memory_space<vmem>>, vector<8x128xf32>,
    %c0_i32_8 = arith.constant 0 : i32
    %9 = arith.cmpi eq, %arg2, %c0_i32_8 : i32
    %10 = arith.extui %9 : i1 to i32
    %c0_i32_9 = arith.constant 0 : i32
    %11 = arith.cmpi ne, %10, %c0_i32_9 : i32
    scf.if %11 {
      %c0_10 = arith.constant 0 : index
      %c0_11 = arith.constant 0 : index
      %12 = vector.load %arg7[%c0_10, %c0_11] : memref<8x128xf32, #tpu.memory_space<vmem>>, vector<8x128xf32>
      %c0_12 = arith.constant 0 : index
      %c0_13 = arith.constant 0 : index
      %13 = vector.load %arg5[%c0_12, %c0_13] : memref<1x128xf32, #tpu.memory_space<vmem>>, vector<1x128xf32>
      %14 = vector.broadcast %13 : vector<1x128xf32> to vector<8x128xf32>
      %15 = arith.addf %12, %14 : vector<8x128xf32>
      %16 = arith.negf %15 : vector<8x128xf32>
      %17 = math.exp %16 : vector<8x128xf32>
      %cst_14 = arith.constant 1.000000e+00 : f32
      %18 = vector.broadcast %cst_14 : f32 to vector<8x128xf32>
      %19 = arith.addf %18, %17 : vector<8x128xf32>
      %20 = arith.divf %18, %19 : vector<8x128xf32>
      %21 = arith.mulf %15, %20 : vector<8x128xf32>
      %c0_15 = arith.constant 0 : index
      %c0_16 = arith.constant 0 : index
      %22 = vector.load %arg6[%c0_15, %c0_16] : memref<8x128xf32, #tpu.memory_space<vmem>>, vector<8x128xf32>
      tpu.vector_store %arg6[%c0_15, %c0_16], %21 {strides = array<i32>} : memref<8x128xf32, #tpu.memory_space<vmem>>, vector<8x128xf32>,
    } else {
    }
    return
  }
  func.func @transform_0(%arg0: i32, %arg1: i32, %arg2: i32) -> (i32, i32) {
    %c0_i32 = arith.constant 0 : i32
    return %arg0, %arg2 : i32, i32
  }
  func.func @transform_1(%arg0: i32, %arg1: i32, %arg2: i32) -> (i32, i32) {
    %c0_i32 = arith.constant 0 : i32
    return %arg2, %arg1 : i32, i32
  }
  func.func @transform_2(%arg0: i32, %arg1: i32, %arg2: i32) -> (i32, i32) {
    %c0_i32 = arith.constant 0 : i32
    %c0_i32_0 = arith.constant 0 : i32
    return %c0_i32, %arg1 : i32, i32
  }
  func.func @transform_3(%arg0: i32, %arg1: i32, %arg2: i32) -> (i32, i32) {
    %c0_i32 = arith.constant 0 : i32
    return %arg0, %arg1 : i32, i32
  }
}

</mosaic_0001>

<llo_original>
// kernel: tpu_custom_call.1
$region0: #{tpu_custom_call.1}
  #allocation0 [shape = 'u32[]', space=smem, size = 0x4, offset = 0x4, fixed_abs, tag = 'smem constant byte address 0x4 - core index']
  #allocation1 [shape = 'u32[144,128]{1,0:T(1,128)}', space=vmem, size = 0x12000, scoped, tag = 'internal scratch']
  #allocation2 [shape = 'f32[8,128]{1,0:T(8,128)}', space=vmem, size = 0x1000, scoped, tag = 'scratch operand']
  %s0 = inlined_call_operand.hbm [shape: bf16[8,32], index: 0, kind: input, shape index: {}]
  %s1 = inlined_call_operand.hbm [shape: bf16[32,128], index: 1, kind: input, shape index: {}]
  %s2 = inlined_call_operand.vmem [shape: f32[1,128], index: 2, kind: input, shape index: {}]
  %s3 = inlined_call_operand.hbm [shape: f32[8,128], index: 3, kind: output, shape index: {}]
  %s4 = sld [smem:[#allocation0]]
  $region38: #{tpu_custom_call.1} parent=0
    _
  %s6 = ssub.s32 1, %s4
  %s7 = scalar_select 0, %s6, %s4
  $region1: #{tpu_custom_call.1} parent=0
    #allocation3 [shape = 'u8[2048]{0}', space=vmem, size = 0x800, scoped, tag = 'input window, operand 0, single buffered']
    #allocation4 [shape = 's32[1]{0}', space=sflag, size = 0x4, scoped, tag = 'scoped memory for tpu_custom_call.1']
    #allocation5 [shape = 's32[1]{0}', space=sflag, size = 0x4, scoped, tag = 'scoped memory for tpu_custom_call.1']
    #allocation6 [shape = 'u8[8192]{0}', space=vmem, size = 0x2000, scoped, tag = 'input window, operand 1, single buffered']
    #allocation7 [shape = 's32[1]{0}', space=sflag, size = 0x4, scoped, tag = 'scoped memory for tpu_custom_call.1']
    #allocation8 [shape = 'u8[4096]{0}', space=vmem, size = 0x1000, scoped, tag = 'output window, operand 0, single buffered']
    %8 = vsyncpa [#allocation4], 0
    %9 = vsyncpa [#allocation7], 0
    %10 = vsyncpa [#allocation5], 0
    // Predicated region
    $region2: #{tpu_custom_call.1} parent=1 // pred_check
      _
    $region3: #{tpu_custom_call.1} parent=1 // pred_check_branch
      %12 = sbr.rel (0) target = $region5
    $region4: #{tpu_custom_call.1} parent=1 // pred_region
      %s14 = ssub.s32 64, 64
      %15 = vsyncadd [#allocation4], %s14
      %s17 = sshll.u32 [#allocation3], 4
      %s18 = int_to_ptr.vmem [resolvable:$true] %s17
      %20 = dma.hbm_to_vmem [thread:$0]  %s0, 64, %s18, [#allocation4]
    $region5: #{tpu_custom_call.1} parent=1 // pred_fallthru
      _
    // Predicated region
    $region6: #{tpu_custom_call.1} parent=1 // pred_check
      _
    $region7: #{tpu_custom_call.1} parent=1 // pred_check_branch
      %22 = sbr.rel (0) target = $region9
    $region8: #{tpu_custom_call.1} parent=1 // pred_region
      %s24 = ssub.s32 256, 256
      %25 = vsyncadd [#allocation7], %s24
      %s26 = sshll.u32 [#allocation6], 4
      %s27 = int_to_ptr.vmem [resolvable:$true] %s26
      %32 = dma.hbm_to_vmem [thread:$0]  %s1, 256, %s27, [#allocation7], 64, 64, 4
    $region9: #{tpu_custom_call.1} parent=1 // pred_fallthru
      _
    // Predicated region
    $region10: #{tpu_custom_call.1} parent=1 // pred_check
      _
    $region11: #{tpu_custom_call.1} parent=1 // pred_check_branch
      %34 = sbr.rel (0) target = $region13
    $region12: #{tpu_custom_call.1} parent=1 // pred_region
      _
    $region13: #{tpu_custom_call.1} parent=1 // pred_fallthru
      _
    // Predicated region
    $region14: #{tpu_custom_call.1} parent=1 // pred_check
      _
    $region15: #{tpu_custom_call.1} parent=1 // pred_check_branch
      %36 = sbr.rel (0) target = $region17
    $region16: #{tpu_custom_call.1} parent=1 // pred_region
      %37 = dma.done [#allocation4], 64
    $region17: #{tpu_custom_call.1} parent=1 // pred_fallthru
      _
    // Predicated region
    $region18: #{tpu_custom_call.1} parent=1 // pred_check
      _
    $region19: #{tpu_custom_call.1} parent=1 // pred_check_branch
      %39 = sbr.rel (0) target = $region21
    $region20: #{tpu_custom_call.1} parent=1 // pred_region
      %40 = dma.done [#allocation7], 256
    $region21: #{tpu_custom_call.1} parent=1 // pred_fallthru
      _
    %p42 = scmp.eq.s32.totalorder 0, 0
    // Predicated region
    $region22: #{tpu_custom_call.1} parent=1 // pred_check
      %p43 = pneg %p42
    $region23: #{tpu_custom_call.1} parent=1 // pred_check_branch
      %45 = sbr.rel (%p43) target = $region25
    $region24: #{tpu_custom_call.1} parent=1 // pred_region
      %46 = vst [vmem:[#allocation2] sm:$0xff] 0.0
    $region25: #{tpu_custom_call.1} parent=1 // pred_fallthru
      _
    %v47 = vld [vmem:[#allocation2] sm:$0xff]
    %v48 = vld [vmem:[#allocation3] sm:$0xf]
    %v49 = vld [vmem:[#allocation6] sm:$0xf]
    %v50 = vld [vmem:[#allocation6 + $0x4] sm:$0xf]
    %v51 = vld [vmem:[#allocation6 + $0x8] sm:$0xf]
    %v52 = vld [vmem:[#allocation6 + $0xc] sm:$0xf]
    %v57 = vunpack.c.l.b16 %v49
    %v58 = vunpack.c.l.b16 %v50
    %v59 = vunpack.c.l.b16 %v51
    %v60 = vunpack.c.l.b16 %v52
    %v61 = vpack.c.b16 %v58, %v57
    %v62 = vpack.c.b16 %v60, %v59
    %vm65 = vcmask 261120
    %v67 = vsel %vm65, %v48, 0
    %69 = vmatprep.subr.bf16.mxu0 0
    %70 = vmatpush1.bf16.msra.mxu0 0
    %71 = vmatprep.subr.bf16.mxu0 0
    %72 = vmatpush1.bf16.msra.mxu0 0
    %73 = vmatprep.subr.bf16.mxu0 0
    %74 = vmatpush1.bf16.msra.mxu0 0
    %75 = vmatprep.subr.bf16.mxu0 0
    %76 = vmatpush1.bf16.msra.mxu0 0
    %77 = vmatprep.subr.bf16.mxu0 0
    %78 = vmatpush1.bf16.msra.mxu0 0
    %79 = vmatprep.subr.bf16.mxu0 0
    %80 = vmatpush1.bf16.msra.mxu0 0
    %81 = vmatprep.subr.bf16.mxu0 0
    %82 = vmatpush1.bf16.msra.mxu0 %v62
    %83 = vmatprep.subr.bf16.mxu0 0
    %84 = vmatpush1.bf16.msra.mxu0 %v61
    %85 = vmatprep.subr.bf16.mxu0 0
    %86 = vmatpush2.bf16.msra.mxu0 0
    %87 = vmatprep.subr.bf16.mxu0 0
    %88 = vmatpush2.bf16.msra.mxu0 0
    %89 = vmatprep.subr.bf16.mxu0 0
    %90 = vmatpush2.bf16.msra.mxu0 0
    %91 = vmatprep.subr.bf16.mxu0 0
    %92 = vmatpush2.bf16.msra.mxu0 0
    %93 = vmatprep.subr.bf16.mxu0 0
    %94 = vmatpush2.bf16.msra.mxu0 0
    %95 = vmatprep.subr.bf16.mxu0 0
    %96 = vmatpush2.bf16.msra.mxu0 0
    %97 = vmatprep.subr.bf16.mxu0 0
    %98 = vmatpush2.bf16.msra.mxu0 0
    %99 = vmatprep.subr.bf16.mxu0 0
    %100 = vmatpush2.bf16.msra.mxu0 0
    %101 = vmatprep.mubr.bf16.mxu0 0
    %102 = vmatmul.mubr.bf16.gmra.mxu0 %v67
    %v103 = vpop.f32.mrf.mxu0
    %v104 = vadd.f32 0.0, %v103
    %v105 = vpop.f32.mrf.mxu0
    %v106 = vpop.f32.mrf.mxu0
    %v107 = vpop.f32.mrf.mxu0
    %108 = vdwg.mxu0
    %v109 = vadd.f32 %v47, %v104
    %110 = vst [vmem:[#allocation2] sm:$0xff] %v109
    // Predicated region
    $region26: #{tpu_custom_call.1} parent=1 // pred_check
      %p111 = pneg %p42
    $region27: #{tpu_custom_call.1} parent=1 // pred_check_branch
      %113 = sbr.rel (%p111) target = $region29
    $region28: #{tpu_custom_call.1} parent=1 // pred_region
      %v114 = vld [vmem:[#allocation2] sm:$0xff]
      %v115 = vld [vmem:[%s2] sm:$0x1]
      %v117 = vlaneseq
      %v118 = vshrl.u32 %v117, 7
      %v119 = vsub.s32 0, %v118
      %v120 = vrot.slane %v115, %v119
      %v122 = vadd.f32 %v114, %v120
      %v123 = vxor.u32 %v122, 2147483648
      %v124 = vmul.f32 %v123, 1.442695
      %v125 = vpow.pop %v124
      %v126 = vadd.f32 %v125, 1.0
      %v127 = vrcp.pop %v126
      %v128 = vmul.f32 1.0, %v127
      %v129 = vmul.f32 %v122, %v128
      %130 = vst [vmem:[#allocation8] sm:$0xff] %v129
    $region29: #{tpu_custom_call.1} parent=1 // pred_fallthru
      _
    // Predicated region
    $region30: #{tpu_custom_call.1} parent=1 // pred_check
      _
    $region31: #{tpu_custom_call.1} parent=1 // pred_check_branch
      %132 = sbr.rel (0) target = $region33
    $region32: #{tpu_custom_call.1} parent=1 // pred_region
      %s134 = ssub.s32 128, 128
      %135 = vsyncadd [#allocation5], %s134
      %s137 = sshll.u32 [#allocation8], 4
      %s138 = int_to_ptr.vmem [resolvable:$true] %s137
      %140 = dma.vmem_to_hbm [thread:$0]  %s138, 128, %s3, [#allocation5]
    $region33: #{tpu_custom_call.1} parent=1 // pred_fallthru
      _
    // Predicated region
    $region34: #{tpu_custom_call.1} parent=1 // pred_check
      _
    $region35: #{tpu_custom_call.1} parent=1 // pred_check_branch
      %142 = sbr.rel (0) target = $region37
    $region36: #{tpu_custom_call.1} parent=1 // pred_region
      %143 = dma.done [#allocation5], 128
    $region37: #{tpu_custom_call.1} parent=1 // pred_fallthru
      _
    %144 = vsyncpa [#allocation4], 1
    %145 = vsyncpa [#allocation7], 1
    %146 = vsyncpa [#allocation5], 1

</llo_original>
